<compile_context>
chip_gen: v7x
topology: tpu7x:2x2x1
jax: 0.10.0
libtpu: 0.0.40
codegen_flags: <defaults>
</compile_context>

<pallas_src>
import functools

import jax
import jax.numpy as jnp
from jax.experimental import pallas as pl
from jax.experimental.pallas import tpu as pltpu


def mlp_kernel(x_ref, w1_ref, b1_ref, w2_ref, b2_ref, w3_ref, b3_ref,
               wo_ref, bo_ref, o_ref):
    # x arrives untransposed as (tile_b, D); contracting its feature dim puts
    # the batch in the lane dimension of every intermediate, so the final
    # (OP, tile_b) store is lane-dense (no masked vst for O=1).
    x_bf = x_ref[...].astype(jnp.bfloat16)                       # (tile_b, D)

    h = jnp.dot(w1_ref[...], x_bf.T,                             # (H, tile_b)
                preferred_element_type=jnp.float32)
    h = jnp.maximum(h + b1_ref[...], 0.0)

    h = jnp.dot(w2_ref[...], h.astype(jnp.bfloat16),
                preferred_element_type=jnp.float32)
    h = jnp.maximum(h + b2_ref[...], 0.0)

    h = jnp.dot(w3_ref[...], h.astype(jnp.bfloat16),
                preferred_element_type=jnp.float32)
    h = jnp.maximum(h + b3_ref[...], 0.0)

    y = jnp.dot(wo_ref[...], h.astype(jnp.bfloat16),
                preferred_element_type=jnp.float32) + bo_ref[...]
    # out_nl is None in the default MlpNetwork config -> no output nonlinearity.
    o_ref[...] = y.astype(o_ref.dtype)


def _pick_tile_b(batch):
    # Lane-dense batch tiles (multiples of 128).  Prefer the largest tile that
    # still leaves >=2 grid steps (v7x megacore sharding); per-step VMEM at
    # tile_b=4096 is only a few MiB, fine on every generation's default limit.
    for t in (4096, 2048, 1024, 512, 256, 128):
        if batch >= 2 * t:
            return t
    return 128


def prepare_params(params):
    """One-time (hoisted) padding + bf16 cast of PyTorch-layout params
    (weights (out, in), biases (out,)).  Hidden rows are kept at H (sublane-
    aligned), only the output rows are padded to 8; biases stay f32 columns."""
    (w1, b1), (w2, b2), (w3, b3), (wo, bo) = params
    H, D = w1.shape
    O = wo.shape[0]
    HP = int(pl.cdiv(H, 8)) * 8            # sublane-align hidden rows (no 128 M-pad)
    OP = max(8, int(pl.cdiv(O, 8)) * 8)    # output rows -> full sublane group
    bf16, f32 = jnp.bfloat16, jnp.float32

    def pad_w(w, rows, cols):
        out = jnp.zeros((rows, cols), f32)
        out = out.at[:w.shape[0], :w.shape[1]].set(jnp.asarray(w, f32))
        return out.astype(bf16)            # bf16 MXU operand

    def pad_b(b, rows):
        out = jnp.zeros((rows, 1), f32)
        return out.at[:b.shape[0], 0].set(jnp.asarray(b, f32))

    return (pad_w(w1, HP, D),  pad_b(b1, HP),
            pad_w(w2, HP, HP), pad_b(b2, HP),
            pad_w(w3, HP, HP), pad_b(b3, HP),
            pad_w(wo, OP, HP), pad_b(bo, OP))


@functools.partial(jax.jit, static_argnames=("output_dim", "tile_b"))
def mlp_forward(x, padded_params, *, output_dim=1, tile_b=None):
    """Fused MLP forward.  x: (B, input_dim) -> (B, output_dim)."""
    B, D = x.shape
    w1p, b1p, w2p, b2p, w3p, b3p, wop, bop = padded_params
    HP, Dw = w1p.shape
    OP = wop.shape[0]
    assert Dw == D, "input_dim mismatch between x and padded params"

    if tile_b is None:
        tile_b = _pick_tile_b(B)
    assert tile_b % 128 == 0, "tile_b must be a multiple of 128 (lane width)"

    Bp = int(pl.cdiv(B, tile_b)) * tile_b
    grid = (Bp // tile_b,)

    xf = jnp.asarray(x, jnp.float32)
    if Bp != B:
        xf = jnp.pad(xf, ((0, Bp - B), (0, 0)))      # pad batch rows only

    rep = lambda i: (0, 0)     # weights/biases: same resident block every tile

    yt = pl.pallas_call(
        mlp_kernel,
        out_shape=jax.ShapeDtypeStruct((OP, Bp), jnp.float32),
        grid_spec=pl.GridSpec(
            grid=grid,
            in_specs=[
                pl.BlockSpec((tile_b, D), lambda i: (i, 0)),      # x untransposed
                pl.BlockSpec((HP, D), rep), pl.BlockSpec((HP, 1), rep),
                pl.BlockSpec((HP, HP), rep), pl.BlockSpec((HP, 1), rep),
                pl.BlockSpec((HP, HP), rep), pl.BlockSpec((HP, 1), rep),
                pl.BlockSpec((OP, HP), rep), pl.BlockSpec((OP, 1), rep),
            ],
            out_specs=pl.BlockSpec((OP, tile_b), lambda i: (0, i)),  # lane-dense
        ),
        compiler_params=pltpu.CompilerParams(
            dimension_semantics=("parallel",)),   # shard batch tiles across TCs
    )(xf, w1p, b1p, w2p, b2p, w3p, b3p, wop, bop)

    return yt[:output_dim, :B].T                                 # back to (B, O)


def init_params(key, input_dim, n_units=64, output_dim=1):
    """Deterministic synthetic init matching nn.Linear layout:
    weight (out, in), bias (out,)."""
    ks = jax.random.split(key, 8)

    def linear(kw, kb, fan_in, fan_out):
        bound = 1.0 / jnp.sqrt(fan_in)
        w = jax.random.uniform(kw, (fan_out, fan_in), jnp.float32, -bound, bound)
        b = jax.random.uniform(kb, (fan_out,), jnp.float32, -bound, bound)
        return w, b

    p1 = linear(ks[0], ks[1], input_dim, n_units)
    p2 = linear(ks[2], ks[3], n_units, n_units)
    p3 = linear(ks[4], ks[5], n_units, n_units)
    po = linear(ks[6], ks[7], n_units, output_dim)
    return (p1, p2, p3, po)


def mlp_reference(x, params):
    (w1, b1), (w2, b2), (w3, b3), (wo, bo) = params
    h = jnp.maximum(x.astype(jnp.float32) @ w1.T + b1, 0.0)
    h = jnp.maximum(h @ w2.T + b2, 0.0)
    h = jnp.maximum(h @ w3.T + b3, 0.0)
    return h @ wo.T + bo


if __name__ == "__main__":
    key = jax.random.PRNGKey(0)
    k_x, k_p = jax.random.split(key)

    # batch, input_dim, n_units, output_dim.  B=200 exercises batch padding and
    # a 2-step "parallel" grid at tile_b=128.
    B, D, H, O = 200, 32, 64, 1
    x = jax.random.normal(k_x, (B, D), dtype=jnp.float32)
    params = init_params(k_p, D, n_units=H, output_dim=O)

    padded = prepare_params(params)      # one-time pad + bf16 cast (hoisted)

    out = jax.block_until_ready(mlp_forward(x, padded, output_dim=O))
    ref = mlp_reference(x, params)

    assert out.shape == (B, O)
    max_err = float(jnp.max(jnp.abs(out - ref)))
    # bf16 MXU operands with f32 accumulation -> loosened tolerance vs f32 ref.
    assert jnp.allclose(out, ref, atol=5e-2, rtol=5e-2), max_err

    print("KERNEL_OK")
</pallas_src>

<mosaic_0001>
module attributes {stable_mosaic.version = 11 : i64} {
  func.func @mlp_kernel(%arg0: i32, %arg1: memref<128x32xf32, #tpu.memory_space<vmem>>, %arg2: memref<64x32xbf16, #tpu.memory_space<vmem>>, %arg3: memref<64x1xf32, #tpu.memory_space<vmem>>, %arg4: memref<64x64xbf16, #tpu.memory_space<vmem>>, %arg5: memref<64x1xf32, #tpu.memory_space<vmem>>, %arg6: memref<64x64xbf16, #tpu.memory_space<vmem>>, %arg7: memref<64x1xf32, #tpu.memory_space<vmem>>, %arg8: memref<8x64xbf16, #tpu.memory_space<vmem>>, %arg9: memref<8x1xf32, #tpu.memory_space<vmem>>, %arg10: memref<8x128xf32, #tpu.memory_space<vmem>>) attributes {dimension_semantics = [#tpu.dimension_semantics<parallel>], iteration_bounds = array<i64: 2>, scalar_prefetch = 0 : i64, scratch_operands = 0 : i64, tpu.core_type = #tpu.core_type<tc>, window_params = [{transform_indices = @transform_0, window_bounds = array<i64: 128, 32>}, {pipeline_mode = #tpu.pipeline_mode<synchronous>, transform_indices = @transform_1, window_bounds = array<i64: 64, 32>}, {pipeline_mode = #tpu.pipeline_mode<synchronous>, transform_indices = @transform_2, window_bounds = array<i64: 64, 1>}, {pipeline_mode = #tpu.pipeline_mode<synchronous>, transform_indices = @transform_3, window_bounds = array<i64: 64, 64>}, {pipeline_mode = #tpu.pipeline_mode<synchronous>, transform_indices = @transform_4, window_bounds = array<i64: 64, 1>}, {pipeline_mode = #tpu.pipeline_mode<synchronous>, transform_indices = @transform_5, window_bounds = array<i64: 64, 64>}, {pipeline_mode = #tpu.pipeline_mode<synchronous>, transform_indices = @transform_6, window_bounds = array<i64: 64, 1>}, {pipeline_mode = #tpu.pipeline_mode<synchronous>, transform_indices = @transform_7, window_bounds = array<i64: 8, 64>}, {pipeline_mode = #tpu.pipeline_mode<synchronous>, transform_indices = @transform_8, window_bounds = array<i64: 8, 1>}, {transform_indices = @transform_9, window_bounds = array<i64: 8, 128>}]} {
    %c0 = arith.constant 0 : index
    %c0_0 = arith.constant 0 : index
    %0 = vector.load %arg1[%c0, %c0_0] : memref<128x32xf32, #tpu.memory_space<vmem>>, vector<128x32xf32>
    %1 = arith.truncf %0 : vector<128x32xf32> to vector<128x32xbf16>
    %c0_1 = arith.constant 0 : index
    %c0_2 = arith.constant 0 : index
    %2 = vector.load %arg2[%c0_1, %c0_2] : memref<64x32xbf16, #tpu.memory_space<vmem>>, vector<64x32xbf16>
    %3 = tpu.transpose %1, [1, 0] : vector<128x32xbf16> -> vector<32x128xbf16>
    %cst = arith.constant dense<0.000000e+00> : vector<64x128xf32>
    %4 = tpu.matmul %2, %3, %cst {dimension_numbers = #tpu.dot_dimension_numbers<[1], [0], [0], [1], [0, 0, 1, 1], [], []>} : vector<64x32xbf16>, vector<32x128xbf16>, vector<64x128xf32> -> vector<64x128xf32>
    %c0_3 = arith.constant 0 : index
    %c0_4 = arith.constant 0 : index
    %5 = vector.load %arg3[%c0_3, %c0_4] : memref<64x1xf32, #tpu.memory_space<vmem>>, vector<64x1xf32>
    %6 = vector.broadcast %5 : vector<64x1xf32> to vector<64x128xf32>
    %7 = arith.addf %4, %6 : vector<64x128xf32>
    %cst_5 = arith.constant 0.000000e+00 : f32
    %8 = vector.broadcast %cst_5 : f32 to vector<64x128xf32>
    %9 = arith.maximumf %7, %8 : vector<64x128xf32>
    %c0_6 = arith.constant 0 : index
    %c0_7 = arith.constant 0 : index
    %10 = vector.load %arg4[%c0_6, %c0_7] : memref<64x64xbf16, #tpu.memory_space<vmem>>, vector<64x64xbf16>
    %11 = arith.truncf %9 : vector<64x128xf32> to vector<64x128xbf16>
    %cst_8 = arith.constant dense<0.000000e+00> : vector<64x128xf32>
    %12 = tpu.matmul %10, %11, %cst_8 {dimension_numbers = #tpu.dot_dimension_numbers<[1], [0], [0], [1], [0, 0, 1, 1], [], []>} : vector<64x64xbf16>, vector<64x128xbf16>, vector<64x128xf32> -> vector<64x128xf32>
    %c0_9 = arith.constant 0 : index
    %c0_10 = arith.constant 0 : index
    %13 = vector.load %arg5[%c0_9, %c0_10] : memref<64x1xf32, #tpu.memory_space<vmem>>, vector<64x1xf32>
    %14 = vector.broadcast %13 : vector<64x1xf32> to vector<64x128xf32>
    %15 = arith.addf %12, %14 : vector<64x128xf32>
    %cst_11 = arith.constant 0.000000e+00 : f32
    %16 = vector.broadcast %cst_11 : f32 to vector<64x128xf32>
    %17 = arith.maximumf %15, %16 : vector<64x128xf32>
    %c0_12 = arith.constant 0 : index
    %c0_13 = arith.constant 0 : index
    %18 = vector.load %arg6[%c0_12, %c0_13] : memref<64x64xbf16, #tpu.memory_space<vmem>>, vector<64x64xbf16>
    %19 = arith.truncf %17 : vector<64x128xf32> to vector<64x128xbf16>
    %cst_14 = arith.constant dense<0.000000e+00> : vector<64x128xf32>
    %20 = tpu.matmul %18, %19, %cst_14 {dimension_numbers = #tpu.dot_dimension_numbers<[1], [0], [0], [1], [0, 0, 1, 1], [], []>} : vector<64x64xbf16>, vector<64x128xbf16>, vector<64x128xf32> -> vector<64x128xf32>
    %c0_15 = arith.constant 0 : index
    %c0_16 = arith.constant 0 : index
    %21 = vector.load %arg7[%c0_15, %c0_16] : memref<64x1xf32, #tpu.memory_space<vmem>>, vector<64x1xf32>
    %22 = vector.broadcast %21 : vector<64x1xf32> to vector<64x128xf32>
    %23 = arith.addf %20, %22 : vector<64x128xf32>
    %cst_17 = arith.constant 0.000000e+00 : f32
    %24 = vector.broadcast %cst_17 : f32 to vector<64x128xf32>
    %25 = arith.maximumf %23, %24 : vector<64x128xf32>
    %c0_18 = arith.constant 0 : index
    %c0_19 = arith.constant 0 : index
    %26 = vector.load %arg8[%c0_18, %c0_19] : memref<8x64xbf16, #tpu.memory_space<vmem>>, vector<8x64xbf16>
    %27 = arith.truncf %25 : vector<64x128xf32> to vector<64x128xbf16>
    %cst_20 = arith.constant dense<0.000000e+00> : vector<8x128xf32>
    %28 = tpu.matmul %26, %27, %cst_20 {dimension_numbers = #tpu.dot_dimension_numbers<[1], [0], [0], [1], [0, 0, 1, 1], [], []>} : vector<8x64xbf16>, vector<64x128xbf16>, vector<8x128xf32> -> vector<8x128xf32>
    %c0_21 = arith.constant 0 : index
    %c0_22 = arith.constant 0 : index
    %29 = vector.load %arg9[%c0_21, %c0_22] : memref<8x1xf32, #tpu.memory_space<vmem>>, vector<8x1xf32>
    %30 = vector.broadcast %29 : vector<8x1xf32> to vector<8x128xf32>
    %31 = arith.addf %28, %30 : vector<8x128xf32>
    %c0_23 = arith.constant 0 : index
    %c0_24 = arith.constant 0 : index
    %32 = vector.load %arg10[%c0_23, %c0_24] : memref<8x128xf32, #tpu.memory_space<vmem>>, vector<8x128xf32>
    tpu.vector_store %arg10[%c0_23, %c0_24], %31 {strides = array<i32>} : memref<8x128xf32, #tpu.memory_space<vmem>>, vector<8x128xf32>,
    return
  }
  func.func @transform_0(%arg0: i32) -> (i32, i32) {
    %c0_i32 = arith.constant 0 : i32
    %c0_i32_0 = arith.constant 0 : i32
    return %arg0, %c0_i32 : i32, i32
  }
  func.func @transform_1(%arg0: i32) -> (i32, i32) {
    %c0_i32 = arith.constant 0 : i32
    %c0_i32_0 = arith.constant 0 : i32
    %c0_i32_1 = arith.constant 0 : i32
    return %c0_i32, %c0_i32_0 : i32, i32
  }
  func.func @transform_2(%arg0: i32) -> (i32, i32) {
    %c0_i32 = arith.constant 0 : i32
    %c0_i32_0 = arith.constant 0 : i32
    %c0_i32_1 = arith.constant 0 : i32
    return %c0_i32, %c0_i32_0 : i32, i32
  }
  func.func @transform_3(%arg0: i32) -> (i32, i32) {
    %c0_i32 = arith.constant 0 : i32
    %c0_i32_0 = arith.constant 0 : i32
    %c0_i32_1 = arith.constant 0 : i32
    return %c0_i32, %c0_i32_0 : i32, i32
  }
  func.func @transform_4(%arg0: i32) -> (i32, i32) {
    %c0_i32 = arith.constant 0 : i32
    %c0_i32_0 = arith.constant 0 : i32
    %c0_i32_1 = arith.constant 0 : i32
    return %c0_i32, %c0_i32_0 : i32, i32
  }
  func.func @transform_5(%arg0: i32) -> (i32, i32) {
    %c0_i32 = arith.constant 0 : i32
    %c0_i32_0 = arith.constant 0 : i32
    %c0_i32_1 = arith.constant 0 : i32
    return %c0_i32, %c0_i32_0 : i32, i32
  }
  func.func @transform_6(%arg0: i32) -> (i32, i32) {
    %c0_i32 = arith.constant 0 : i32
    %c0_i32_0 = arith.constant 0 : i32
    %c0_i32_1 = arith.constant 0 : i32
    return %c0_i32, %c0_i32_0 : i32, i32
  }
  func.func @transform_7(%arg0: i32) -> (i32, i32) {
    %c0_i32 = arith.constant 0 : i32
    %c0_i32_0 = arith.constant 0 : i32
    %c0_i32_1 = arith.constant 0 : i32
    return %c0_i32, %c0_i32_0 : i32, i32
  }
  func.func @transform_8(%arg0: i32) -> (i32, i32) {
    %c0_i32 = arith.constant 0 : i32
    %c0_i32_0 = arith.constant 0 : i32
    %c0_i32_1 = arith.constant 0 : i32
    return %c0_i32, %c0_i32_0 : i32, i32
  }
  func.func @transform_9(%arg0: i32) -> (i32, i32) {
    %c0_i32 = arith.constant 0 : i32
    %c0_i32_0 = arith.constant 0 : i32
    return %c0_i32, %arg0 : i32, i32
  }
}

</mosaic_0001>

<llo_original>
// kernel: mlp_forward.1
$region0: #{mlp_forward.1}
  #allocation0 [shape = 'u32[]', space=smem, size = 0x4, offset = 0x4, fixed_abs, tag = 'smem constant byte address 0x4 - core index']
  #allocation1 [shape = 'u32[144,128]{1,0:T(1,128)}', space=vmem, size = 0x12000, scoped, tag = 'internal scratch']
  %s0 = inlined_call_operand.vmem [shape: f32[256,32], index: 0, kind: input, shape index: {}]
  %s1 = inlined_call_operand.vmem [shape: bf16[64,32], index: 1, kind: input, shape index: {}]
  %s2 = inlined_call_operand.vmem [shape: f32[64,1], index: 2, kind: input, shape index: {}]
  %s3 = inlined_call_operand.vmem [shape: bf16[64,64], index: 3, kind: input, shape index: {}]
  %s4 = inlined_call_operand.vmem [shape: f32[64,1], index: 4, kind: input, shape index: {}]
  %s5 = inlined_call_operand.vmem [shape: bf16[64,64], index: 5, kind: input, shape index: {}]
  %s6 = inlined_call_operand.vmem [shape: f32[64,1], index: 6, kind: input, shape index: {}]
  %s7 = inlined_call_operand.vmem [shape: bf16[8,64], index: 7, kind: input, shape index: {}]
  %s8 = inlined_call_operand.vmem [shape: f32[8,1], index: 8, kind: input, shape index: {}]
  %s9 = inlined_call_operand.vmem [shape: f32[8,256], index: 9, kind: output, shape index: {}]
  %s10 = sld [smem:[#allocation0]]
  $region69: #{mlp_forward.1} parent=0
    _
  %s12 = ssub.s32 1, %s10
  %s13 = scalar_select 0, %s12, %s10
  loop: start=0, step=1, limit=4
  $region2: #{mlp_forward.1} parent=0 // loop_pre_header
    _
  $region3: #{mlp_forward.1} parent=0 // loop_header
    %s15 = sphi 0, %s19
    %p16 = scmp.ge.s32.totalorder %s15, 4
    %s25 = sphi 0, %s27
    %s28 = sphi 0, %s25
    %s29 = sphi 0, %s28
    %s45 = sphi 0, %s29
    %s49 = sphi 0, %s49
    %s51 = sphi 0, %s49
    %s52 = sphi 0, %s51
    %s66 = sphi 0, %s52
    %s70 = sphi 0, %s70
    %s72 = sphi 0, %s70
    %s73 = sphi 0, %s72
    %s87 = sphi 0, %s73
    %s91 = sphi 0, %s91
    %s93 = sphi 0, %s91
    %s94 = sphi 0, %s93
    %s108 = sphi 0, %s94
    %s112 = sphi 0, %s112
    %s114 = sphi 0, %s112
    %s115 = sphi 0, %s114
    %s129 = sphi 0, %s115
    %s133 = sphi 0, %s133
    %s135 = sphi 0, %s133
    %s136 = sphi 0, %s135
    %s150 = sphi 0, %s136
    %s154 = sphi 0, %s154
    %s156 = sphi 0, %s154
    %s157 = sphi 0, %s156
    %s171 = sphi 0, %s157
    %s175 = sphi 0, %s175
    %s177 = sphi 0, %s175
    %s178 = sphi 0, %s177
    %s192 = sphi 0, %s178
    %s196 = sphi 0, %s196
    %s198 = sphi 0, %s196
    %s199 = sphi 0, %s198
    %s213 = sphi 0, %s199
    %s219 = sphi 0, %s221
    %s222 = sphi 0, %s219
    %s223 = sphi 0, %s222
    %s239 = sphi 0, %s223
  $region4: #{mlp_forward.1} parent=0 // loop_header_branch
    %18 = sbr.rel (%p16) target = $region8
  $region5: #{mlp_forward.1} parent=0 // loop_body
    %s20 = ssub.s32 %s15, 1
    %s21 = ssub.s32 %s15, 2
    %s22 = sadd.s32 %s15, 1
    %s23 = ssub.s32 %s15, %s22
    %p24 = scmp.eq.s32.totalorder %s23, 0
    %s26 = sadd.s32 %s25, 1
    %s27 = scalar_select %p24, %s25, %s26
    %p30 = pneg %p24
    %p31 = scmp.eq.s32.totalorder %s15, 1
    %p32 = por %p30, %p31
    %p33 = scmp.ne.s32.totalorder %s25, %s28
    %p34 = scmp.eq.s32.totalorder %s15, 0
    %p35 = por %p33, %p34
    %p36 = scmp.ne.s32.totalorder %s25, %s28
    %p37 = scmp.eq.s32.totalorder %s20, 1
    %p38 = por %p36, %p37
    %p39 = scmp.ne.s32.totalorder %s28, %s29
    %p40 = scmp.eq.s32.totalorder %s20, 0
    %p41 = por %p39, %p40
    %p42 = scmp.ne.s32.totalorder %s28, %s29
    %p43 = scmp.eq.s32.totalorder %s21, 1
    %p44 = por %p42, %p43
    %p46 = scmp.ne.s32.totalorder %s29, %s45
    %p47 = scmp.eq.s32.totalorder %s21, 0
    %p48 = por %p46, %p47
    %s50 = sadd.s32 %s49, 1
    %p53 = scmp.eq.s32.totalorder %s15, 1
    %p54 = scmp.ne.s32.totalorder %s49, %s51
    %p55 = scmp.eq.s32.totalorder %s15, 0
    %p56 = por %p54, %p55
    %p57 = scmp.ne.s32.totalorder %s49, %s51
    %p58 = scmp.eq.s32.totalorder %s20, 1
    %p59 = por %p57, %p58
    %p60 = scmp.ne.s32.totalorder %s51, %s52
    %p61 = scmp.eq.s32.totalorder %s20, 0
    %p62 = por %p60, %p61
    %p63 = scmp.ne.s32.totalorder %s51, %s52
    %p64 = scmp.eq.s32.totalorder %s21, 1
    %p65 = por %p63, %p64
    %p67 = scmp.ne.s32.totalorder %s52, %s66
    %p68 = scmp.eq.s32.totalorder %s21, 0
    %p69 = por %p67, %p68
    %s71 = sadd.s32 %s70, 1
    %p74 = scmp.eq.s32.totalorder %s15, 1
    %p75 = scmp.ne.s32.totalorder %s70, %s72
    %p76 = scmp.eq.s32.totalorder %s15, 0
    %p77 = por %p75, %p76
    %p78 = scmp.ne.s32.totalorder %s70, %s72
    %p79 = scmp.eq.s32.totalorder %s20, 1
    %p80 = por %p78, %p79
    %p81 = scmp.ne.s32.totalorder %s72, %s73
    %p82 = scmp.eq.s32.totalorder %s20, 0
    %p83 = por %p81, %p82
    %p84 = scmp.ne.s32.totalorder %s72, %s73
    %p85 = scmp.eq.s32.totalorder %s21, 1
    %p86 = por %p84, %p85
    %p88 = scmp.ne.s32.totalorder %s73, %s87
    %p89 = scmp.eq.s32.totalorder %s21, 0
    %p90 = por %p88, %p89
    %s92 = sadd.s32 %s91, 1
    %p95 = scmp.eq.s32.totalorder %s15, 1
    %p96 = scmp.ne.s32.totalorder %s91, %s93
    %p97 = scmp.eq.s32.totalorder %s15, 0
    %p98 = por %p96, %p97
    %p99 = scmp.ne.s32.totalorder %s91, %s93
    %p100 = scmp.eq.s32.totalorder %s20, 1
    %p101 = por %p99, %p100
    %p102 = scmp.ne.s32.totalorder %s93, %s94
    %p103 = scmp.eq.s32.totalorder %s20, 0
    %p104 = por %p102, %p103
    %p105 = scmp.ne.s32.totalorder %s93, %s94
    %p106 = scmp.eq.s32.totalorder %s21, 1
    %p107 = por %p105, %p106
    %p109 = scmp.ne.s32.totalorder %s94, %s108
    %p110 = scmp.eq.s32.totalorder %s21, 0
    %p111 = por %p109, %p110
    %s113 = sadd.s32 %s112, 1
    %p116 = scmp.eq.s32.totalorder %s15, 1
    %p117 = scmp.ne.s32.totalorder %s112, %s114
    %p118 = scmp.eq.s32.totalorder %s15, 0
    %p119 = por %p117, %p118
    %p120 = scmp.ne.s32.totalorder %s112, %s114
    %p121 = scmp.eq.s32.totalorder %s20, 1
    %p122 = por %p120, %p121
    %p123 = scmp.ne.s32.totalorder %s114, %s115
    %p124 = scmp.eq.s32.totalorder %s20, 0
    %p125 = por %p123, %p124
    %p126 = scmp.ne.s32.totalorder %s114, %s115
    %p127 = scmp.eq.s32.totalorder %s21, 1
    %p128 = por %p126, %p127
    %p130 = scmp.ne.s32.totalorder %s115, %s129
    %p131 = scmp.eq.s32.totalorder %s21, 0
    %p132 = por %p130, %p131
    %s134 = sadd.s32 %s133, 1
    %p137 = scmp.eq.s32.totalorder %s15, 1
    %p138 = scmp.ne.s32.totalorder %s133, %s135
    %p139 = scmp.eq.s32.totalorder %s15, 0
    %p140 = por %p138, %p139
    %p141 = scmp.ne.s32.totalorder %s133, %s135
    %p142 = scmp.eq.s32.totalorder %s20, 1
    %p143 = por %p141, %p142
    %p144 = scmp.ne.s32.totalorder %s135, %s136
    %p145 = scmp.eq.s32.totalorder %s20, 0
    %p146 = por %p144, %p145
    %p147 = scmp.ne.s32.totalorder %s135, %s136
    %p148 = scmp.eq.s32.totalorder %s21, 1
    %p149 = por %p147, %p148
    %p151 = scmp.ne.s32.totalorder %s136, %s150
    %p152 = scmp.eq.s32.totalorder %s21, 0
    %p153 = por %p151, %p152
    %s155 = sadd.s32 %s154, 1
    %p158 = scmp.eq.s32.totalorder %s15, 1
    %p159 = scmp.ne.s32.totalorder %s154, %s156
    %p160 = scmp.eq.s32.totalorder %s15, 0
    %p161 = por %p159, %p160
    %p162 = scmp.ne.s32.totalorder %s154, %s156
    %p163 = scmp.eq.s32.totalorder %s20, 1
    %p164 = por %p162, %p163
    %p165 = scmp.ne.s32.totalorder %s156, %s157
    %p166 = scmp.eq.s32.totalorder %s20, 0
    %p167 = por %p165, %p166
    %p168 = scmp.ne.s32.totalorder %s156, %s157
    %p169 = scmp.eq.s32.totalorder %s21, 1
    %p170 = por %p168, %p169
    %p172 = scmp.ne.s32.totalorder %s157, %s171
    %p173 = scmp.eq.s32.totalorder %s21, 0
    %p174 = por %p172, %p173
    %s176 = sadd.s32 %s175, 1
    %p179 = scmp.eq.s32.totalorder %s15, 1
    %p180 = scmp.ne.s32.totalorder %s175, %s177
    %p181 = scmp.eq.s32.totalorder %s15, 0
    %p182 = por %p180, %p181
    %p183 = scmp.ne.s32.totalorder %s175, %s177
    %p184 = scmp.eq.s32.totalorder %s20, 1
    %p185 = por %p183, %p184
    %p186 = scmp.ne.s32.totalorder %s177, %s178
    %p187 = scmp.eq.s32.totalorder %s20, 0
    %p188 = por %p186, %p187
    %p189 = scmp.ne.s32.totalorder %s177, %s178
    %p190 = scmp.eq.s32.totalorder %s21, 1
    %p191 = por %p189, %p190
    %p193 = scmp.ne.s32.totalorder %s178, %s192
    %p194 = scmp.eq.s32.totalorder %s21, 0
    %p195 = por %p193, %p194
    %s197 = sadd.s32 %s196, 1
    %p200 = scmp.eq.s32.totalorder %s15, 1
    %p201 = scmp.ne.s32.totalorder %s196, %s198
    %p202 = scmp.eq.s32.totalorder %s15, 0
    %p203 = por %p201, %p202
    %p204 = scmp.ne.s32.totalorder %s196, %s198
    %p205 = scmp.eq.s32.totalorder %s20, 1
    %p206 = por %p204, %p205
    %p207 = scmp.ne.s32.totalorder %s198, %s199
    %p208 = scmp.eq.s32.totalorder %s20, 0
    %p209 = por %p207, %p208
    %p210 = scmp.ne.s32.totalorder %s198, %s199
    %p211 = scmp.eq.s32.totalorder %s21, 1
    %p212 = por %p210, %p211
    %p214 = scmp.ne.s32.totalorder %s199, %s213
    %p215 = scmp.eq.s32.totalorder %s21, 0
    %p216 = por %p214, %p215
    %s217 = ssub.s32 %s15, %s22
    %p218 = scmp.eq.s32.totalorder %s217, 0
    %s220 = sadd.s32 %s219, 1
    %s221 = scalar_select %p218, %s219, %s220
    %p224 = pneg %p218
    %p225 = scmp.eq.s32.totalorder %s15, 1
    %p226 = por %p224, %p225
    %p227 = scmp.ne.s32.totalorder %s219, %s222
    %p228 = scmp.eq.s32.totalorder %s15, 0
    %p229 = por %p227, %p228
    %p230 = scmp.ne.s32.totalorder %s219, %s222
    %p231 = scmp.eq.s32.totalorder %s20, 1
    %p232 = por %p230, %p231
    %p233 = scmp.ne.s32.totalorder %s222, %s223
    %p234 = scmp.eq.s32.totalorder %s20, 0
    %p235 = por %p233, %p234
    %p236 = scmp.ne.s32.totalorder %s222, %s223
    %p237 = scmp.eq.s32.totalorder %s21, 1
    %p238 = por %p236, %p237
    %p240 = scmp.ne.s32.totalorder %s223, %s239
    %p241 = scmp.eq.s32.totalorder %s21, 0
    %p242 = por %p240, %p241
    %p243 = scmp.le.s32.totalorder 1, %s15
    %p244 = scmp.lt.s32.totalorder %s15, 3
    %p245 = pnand %p243, %p244
    %p246 = pneg %p245
    // Predicated region
    $region9: #{mlp_forward.1} parent=5 // pred_check
      _
    $region10: #{mlp_forward.1} parent=5 // pred_check_branch
      %248 = sbr.rel (%p245) target = $region12
    $region11: #{mlp_forward.1} parent=5 // pred_region
      %s249 = ssub.s32 %s15, 1
      // Predicated region
      $region13: #{mlp_forward.1} parent=11 // pred_check
        %p250 = pneg %p62
      $region14: #{mlp_forward.1} parent=11 // pred_check_branch
        %252 = sbr.rel (%p250) target = $region16
      $region15: #{mlp_forward.1} parent=11 // pred_region
        _
      $region16: #{mlp_forward.1} parent=11 // pred_fallthru
        _
      // Predicated region
      $region17: #{mlp_forward.1} parent=11 // pred_check
        %p253 = pneg %p83
      $region18: #{mlp_forward.1} parent=11 // pred_check_branch
        %255 = sbr.rel (%p253) target = $region20
      $region19: #{mlp_forward.1} parent=11 // pred_region
        _
      $region20: #{mlp_forward.1} parent=11 // pred_fallthru
        _
      // Predicated region
      $region21: #{mlp_forward.1} parent=11 // pred_check
        %p256 = pneg %p104
      $region22: #{mlp_forward.1} parent=11 // pred_check_branch
        %258 = sbr.rel (%p256) target = $region24
      $region23: #{mlp_forward.1} parent=11 // pred_region
        _
      $region24: #{mlp_forward.1} parent=11 // pred_fallthru
        _
      // Predicated region
      $region25: #{mlp_forward.1} parent=11 // pred_check
        %p259 = pneg %p125
      $region26: #{mlp_forward.1} parent=11 // pred_check_branch
        %261 = sbr.rel (%p259) target = $region28
      $region27: #{mlp_forward.1} parent=11 // pred_region
        _
      $region28: #{mlp_forward.1} parent=11 // pred_fallthru
        _
      // Predicated region
      $region29: #{mlp_forward.1} parent=11 // pred_check
        %p262 = pneg %p146
      $region30: #{mlp_forward.1} parent=11 // pred_check_branch
        %264 = sbr.rel (%p262) target = $region32
      $region31: #{mlp_forward.1} parent=11 // pred_region
        _
      $region32: #{mlp_forward.1} parent=11 // pred_fallthru
        _
      // Predicated region
      $region33: #{mlp_forward.1} parent=11 // pred_check
        %p265 = pneg %p167
      $region34: #{mlp_forward.1} parent=11 // pred_check_branch
        %267 = sbr.rel (%p265) target = $region36
      $region35: #{mlp_forward.1} parent=11 // pred_region
        _
      $region36: #{mlp_forward.1} parent=11 // pred_fallthru
        _
      // Predicated region
      $region37: #{mlp_forward.1} parent=11 // pred_check
        %p268 = pneg %p188
      $region38: #{mlp_forward.1} parent=11 // pred_check_branch
        %270 = sbr.rel (%p268) target = $region40
      $region39: #{mlp_forward.1} parent=11 // pred_region
        _
      $region40: #{mlp_forward.1} parent=11 // pred_fallthru
        _
      // Predicated region
      $region41: #{mlp_forward.1} parent=11 // pred_check
        %p271 = pneg %p209
      $region42: #{mlp_forward.1} parent=11 // pred_check_branch
        %273 = sbr.rel (%p271) target = $region44
      $region43: #{mlp_forward.1} parent=11 // pred_region
        _
      $region44: #{mlp_forward.1} parent=11 // pred_fallthru
        _
    $region12: #{mlp_forward.1} parent=5 // pred_fallthru
      _
    %p274 = scmp.lt.s32.totalorder %s15, 2
    // Predicated region
    $region45: #{mlp_forward.1} parent=5 // pred_check
      %p275 = pneg %p274
    $region46: #{mlp_forward.1} parent=5 // pred_check_branch
      %277 = sbr.rel (%p275) target = $region48
    $region47: #{mlp_forward.1} parent=5 // pred_region
      // Predicated region
      $region49: #{mlp_forward.1} parent=47 // pred_check
        %p278 = pneg %p35
      $region50: #{mlp_forward.1} parent=47 // pred_check_branch
        %280 = sbr.rel (%p278) target = $region52
      $region51: #{mlp_forward.1} parent=47 // pred_region
        %s281 = smul.u32 16, %s15
        %p282 = scmp.lt.s32.totalorder %s281, 31
        %s283 = scalar_select %p282, %s281, 31
        %s284 = smul.addr %s283, 8
        %s285 = scalar_lea.vmem %s0, %s284
        %s286 = smul.u32 16, %s15
      $region52: #{mlp_forward.1} parent=47 // pred_fallthru
        _
    $region48: #{mlp_forward.1} parent=5 // pred_fallthru
      _
    %p287 = scmp.le.s32.totalorder 1, %s15
    %p288 = scmp.lt.s32.totalorder %s15, 3
    %p289 = pnand %p287, %p288
    %p290 = pneg %p289
    // Predicated region
    $region53: #{mlp_forward.1} parent=5 // pred_check
      _
    $region54: #{mlp_forward.1} parent=5 // pred_check_branch
      %292 = sbr.rel (%p289) target = $region56
    $region55: #{mlp_forward.1} parent=5 // pred_region
      %s293 = ssub.s32 %s15, 1
      %s294 = smul.u32 16, %s20
      %p295 = scmp.lt.s32.totalorder %s294, 31
      %s296 = scalar_select %p295, %s294, 31
      %s297 = smul.addr %s296, 8
      %s298 = scalar_lea.vmem %s0, %s297
      %p299 = pneg %p41
      %p300 = pneg %p38
      %p301 = pneg %p62
      %p302 = pneg %p59
      %p303 = pneg %p83
      %p304 = pneg %p80
      %p305 = pneg %p104
      %p306 = pneg %p101
      %p307 = pneg %p125
      %p308 = pneg %p122
      %p309 = pneg %p146
      %p310 = pneg %p143
      %p311 = pneg %p167
      %p312 = pneg %p164
      %p313 = pneg %p188
      %p314 = pneg %p185
      %p315 = pneg %p209
      %p316 = pneg %p206
      %p317 = pneg %p235
      %p318 = pneg %p232
      %p319 = scmp.lt.s32.totalorder %s20, 1
      %s320 = scalar_select %p319, %s20, 1
      %s321 = smul.addr %s320, 8
      %s322 = scalar_lea.vmem %s9, %s321
      %s323 = smul.u32 16, %s20
      %p324 = scmp.lt.s32.totalorder %s323, 31
      %s325 = scalar_select %p324, %s323, 31
      %s326 = smul.addr %s325, 8
      %s327 = scalar_lea.vmem %s0, %s326
      %s328 = smul.u32 16, %s20
      %p329 = scmp.lt.s32.totalorder %s20, 1
      %s330 = scalar_select %p329, %s20, 1
      %s331 = smul.addr %s330, 8
      %s332 = scalar_lea.vmem %s9, %s331
      %v334 = vld [vmem:[%s327] sm:$0xff]
      %v335 = vld [vmem:[%s327 + $0x8] sm:$0xff]
      %v336 = vld [vmem:[%s327 + $0x10] sm:$0xff]
      %v337 = vld [vmem:[%s327 + $0x18] sm:$0xff]
      %v338 = vld [vmem:[%s327 + $0x20] sm:$0xff]
      %v339 = vld [vmem:[%s327 + $0x28] sm:$0xff]
      %v340 = vld [vmem:[%s327 + $0x30] sm:$0xff]
      %v341 = vld [vmem:[%s327 + $0x38] sm:$0xff]
      %v342 = vld [vmem:[%s327 + $0x40] sm:$0xff]
      %v343 = vld [vmem:[%s327 + $0x48] sm:$0xff]
      %v344 = vld [vmem:[%s327 + $0x50] sm:$0xff]
      %v345 = vld [vmem:[%s327 + $0x58] sm:$0xff]
      %v346 = vld [vmem:[%s327 + $0x60] sm:$0xff]
      %v347 = vld [vmem:[%s327 + $0x68] sm:$0xff]
      %v348 = vld [vmem:[%s327 + $0x70] sm:$0xff]
      %v349 = vld [vmem:[%s327 + $0x78] sm:$0xff]
      %v350 = vpack.c.bf16 %v335, %v334
      %v351 = vpack.c.bf16 %v337, %v336
      %v352 = vpack.c.bf16 %v339, %v338
      %v353 = vpack.c.bf16 %v341, %v340
      %v354 = vpack.c.bf16 %v343, %v342
      %v355 = vpack.c.bf16 %v345, %v344
      %v356 = vpack.c.bf16 %v347, %v346
      %v357 = vpack.c.bf16 %v349, %v348
      %v358 = vld [vmem:[%s1] sm:$0xf]
      %v359 = vld [vmem:[%s1 + $0x4] sm:$0xf]
      %v360 = vld [vmem:[%s1 + $0x8] sm:$0xf]
      %v361 = vld [vmem:[%s1 + $0xc] sm:$0xf]
      %v362 = vld [vmem:[%s1 + $0x10] sm:$0xf]
      %v363 = vld [vmem:[%s1 + $0x14] sm:$0xf]
      %v364 = vld [vmem:[%s1 + $0x18] sm:$0xf]
      %v365 = vld [vmem:[%s1 + $0x1c] sm:$0xf]
      %v366 = vld [vmem:[%s2] sm:$0xff]
      %v367 = vld [vmem:[%s2 + $0x8] sm:$0xff]
      %v368 = vld [vmem:[%s2 + $0x10] sm:$0xff]
      %v369 = vld [vmem:[%s2 + $0x18] sm:$0xff]
      %v370 = vld [vmem:[%s2 + $0x20] sm:$0xff]
      %v371 = vld [vmem:[%s2 + $0x28] sm:$0xff]
      %v372 = vld [vmem:[%s2 + $0x30] sm:$0xff]
      %v373 = vld [vmem:[%s2 + $0x38] sm:$0xff]
      %375 = vset.pattern.permute.xlu0 0
      %376 = vperm.xlu0 %375, %v366
      %v377 = vpop.permute.xlu0 %376
      %380 = vset.pattern.permute.xlu0 0
      %381 = vperm.xlu0 %380, %v367
      %v382 = vpop.permute.xlu0 %381
      %385 = vset.pattern.permute.xlu0 0
      %386 = vperm.xlu0 %385, %v368
      %v387 = vpop.permute.xlu0 %386
      %390 = vset.pattern.permute.xlu0 0
      %391 = vperm.xlu0 %390, %v369
      %v392 = vpop.permute.xlu0 %391
      %395 = vset.pattern.permute.xlu0 0
      %396 = vperm.xlu0 %395, %v370
      %v397 = vpop.permute.xlu0 %396
      %400 = vset.pattern.permute.xlu0 0
      %401 = vperm.xlu0 %400, %v371
      %v402 = vpop.permute.xlu0 %401
      %405 = vset.pattern.permute.xlu0 0
      %406 = vperm.xlu0 %405, %v372
      %v407 = vpop.permute.xlu0 %406
      %410 = vset.pattern.permute.xlu0 0
      %411 = vperm.xlu0 %410, %v373
      %v412 = vpop.permute.xlu0 %411
      %v422 = vunpack.c.l.b16 %v358
      %v423 = vunpack.c.l.b16 %v359
      %v424 = vunpack.c.l.b16 %v360
      %v425 = vunpack.c.l.b16 %v361
      %v426 = vunpack.c.l.b16 %v362
      %v427 = vunpack.c.l.b16 %v363
      %v428 = vunpack.c.l.b16 %v364
      %v429 = vunpack.c.l.b16 %v365
      %v430 = vpack.c.b16 %v423, %v422
      %v431 = vpack.c.b16 %v425, %v424
      %v432 = vpack.c.b16 %v427, %v426
      %v433 = vpack.c.b16 %v429, %v428
      %vm434 = vcmask 261120
      %v436 = vsel %vm434, %v430, 0
      %v439 = vsel %vm434, %v431, 0
      %v442 = vsel %vm434, %v432, 0
      %v445 = vsel %vm434, %v433, 0
      %v448 = vsel %vm434, %v350, 0
      %v451 = vsel %vm434, %v351, 0
      %v454 = vsel %vm434, %v352, 0
      %v457 = vsel %vm434, %v353, 0
      %v460 = vsel %vm434, %v354, 0
      %v463 = vsel %vm434, %v355, 0
      %v466 = vsel %vm434, %v356, 0
      %v469 = vsel %vm434, %v357, 0
      %471 = vmatprep.subr.bf16.mxu0 0
      %472 = vmatpush1.bf16.xpose.msra.mxu0 %v448
      %473 = vmatprep.subr.bf16.mxu0 0
      %474 = vmatpush1.bf16.xpose.msra.mxu0 %v451
      %475 = vmatprep.subr.bf16.mxu0 0
      %476 = vmatpush1.bf16.xpose.msra.mxu0 %v454
      %477 = vmatprep.subr.bf16.mxu0 0
      %478 = vmatpush1.bf16.xpose.msra.mxu0 %v457
      %479 = vmatprep.subr.bf16.mxu0 0
      %480 = vmatpush1.bf16.xpose.msra.mxu0 %v460
      %481 = vmatprep.subr.bf16.mxu0 0
      %482 = vmatpush1.bf16.xpose.msra.mxu0 %v463
      %483 = vmatprep.subr.bf16.mxu0 0
      %484 = vmatpush1.bf16.xpose.msra.mxu0 %v466
      %485 = vmatprep.subr.bf16.mxu0 0
      %486 = vmatpush1.bf16.xpose.msra.mxu0 %v469
      %487 = vmatprep.subr.bf16.mxu0 0
      %488 = vmatpush1.bf16.xpose.msra.mxu0 0
      %489 = vmatprep.subr.bf16.mxu0 0
      %490 = vmatpush1.bf16.xpose.msra.mxu0 0
      %491 = vmatprep.subr.bf16.mxu0 0
      %492 = vmatpush1.bf16.xpose.msra.mxu0 0
      %493 = vmatprep.subr.bf16.mxu0 0
      %494 = vmatpush1.bf16.xpose.msra.mxu0 0
      %495 = vmatprep.subr.bf16.mxu0 0
      %496 = vmatpush1.bf16.xpose.msra.mxu0 0
      %497 = vmatprep.subr.bf16.mxu0 0
      %498 = vmatpush1.bf16.xpose.msra.mxu0 0
      %499 = vmatprep.subr.bf16.mxu0 0
      %500 = vmatpush1.bf16.xpose.msra.mxu0 0
      %501 = vmatprep.subr.bf16.mxu0 0
      %502 = vmatpush1.bf16.xpose.msra.mxu0 0
      %503 = vmatprep.mubr.bf16.mxu0 0
      %504 = vmatmul.mubr.bf16.gmra.mrb[0].mxu0 %v436
      %v505 = vpop.f32.mrb[0].mxu0
      %v506 = vadd.f32 %v377, %v505
      %v507 = vpop.f32.mrb[0].mxu0
      %v508 = vpop.f32.mrb[0].mxu0
      %v509 = vadd.f32 %v382, %v508
      %v510 = vpop.f32.mrb[0].mxu0
      %511 = vmatprep.mubr.bf16.mxu0 0
      %512 = vmatmul.mubr.bf16.gmra.mrb[0].mxu0 %v439
      %v513 = vpop.f32.mrb[0].mxu0
      %v514 = vadd.f32 %v387, %v513
      %v515 = vpop.f32.mrb[0].mxu0
      %v516 = vpop.f32.mrb[0].mxu0
      %v517 = vadd.f32 %v392, %v516
      %v518 = vpop.f32.mrb[0].mxu0
      %519 = vmatprep.mubr.bf16.mxu0 0
      %520 = vmatmul.mubr.bf16.gmra.mrb[0].mxu0 %v442
      %v521 = vpop.f32.mrb[0].mxu0
      %v522 = vadd.f32 %v397, %v521
      %v523 = vpop.f32.mrb[0].mxu0
      %v524 = vpop.f32.mrb[0].mxu0
      %v525 = vadd.f32 %v402, %v524
      %v526 = vpop.f32.mrb[0].mxu0
      %527 = vmatprep.mubr.bf16.mxu0 0
      %528 = vmatmul.mubr.bf16.gmra.mrb[0].mxu0 %v445
      %v529 = vpop.f32.mrb[0].mxu0
      %v530 = vadd.f32 %v407, %v529
      %v531 = vpop.f32.mrb[0].mxu0
      %v532 = vpop.f32.mrb[0].mxu0
      %v533 = vadd.f32 %v412, %v532
      %v534 = vpop.f32.mrb[0].mxu0
      %535 = vdwg.mxu0
      %v536 = vmax.f32 %v506, 0.0
      %v537 = vmax.f32 %v509, 0.0
      %v538 = vmax.f32 %v514, 0.0
      %v539 = vmax.f32 %v517, 0.0
      %v540 = vmax.f32 %v522, 0.0
      %v541 = vmax.f32 %v525, 0.0
      %v542 = vmax.f32 %v530, 0.0
      %v543 = vmax.f32 %v533, 0.0
      %v544 = vld [vmem:[%s3] sm:$0xf]
      %v545 = vld [vmem:[%s3 + $0x4] sm:$0xf]
      %v546 = vld [vmem:[%s3 + $0x8] sm:$0xf]
      %v547 = vld [vmem:[%s3 + $0xc] sm:$0xf]
      %v548 = vld [vmem:[%s3 + $0x10] sm:$0xf]
      %v549 = vld [vmem:[%s3 + $0x14] sm:$0xf]
      %v550 = vld [vmem:[%s3 + $0x18] sm:$0xf]
      %v551 = vld [vmem:[%s3 + $0x1c] sm:$0xf]
      %v552 = vpack.c.bf16 %v537, %v536
      %v553 = vpack.c.bf16 %v539, %v538
      %v554 = vpack.c.bf16 %v541, %v540
      %v555 = vpack.c.bf16 %v543, %v542
      %v556 = vld [vmem:[%s4] sm:$0xff]
      %v557 = vld [vmem:[%s4 + $0x8] sm:$0xff]
      %v558 = vld [vmem:[%s4 + $0x10] sm:$0xff]
      %v559 = vld [vmem:[%s4 + $0x18] sm:$0xff]
      %v560 = vld [vmem:[%s4 + $0x20] sm:$0xff]
      %v561 = vld [vmem:[%s4 + $0x28] sm:$0xff]
      %v562 = vld [vmem:[%s4 + $0x30] sm:$0xff]
      %v563 = vld [vmem:[%s4 + $0x38] sm:$0xff]
      %565 = vset.pattern.permute.xlu0 0
      %566 = vperm.xlu0 %565, %v556
      %v567 = vpop.permute.xlu0 %566
      %570 = vset.pattern.permute.xlu0 0
      %571 = vperm.xlu0 %570, %v557
      %v572 = vpop.permute.xlu0 %571
      %575 = vset.pattern.permute.xlu0 0
      %576 = vperm.xlu0 %575, %v558
      %v577 = vpop.permute.xlu0 %576
      %580 = vset.pattern.permute.xlu0 0
      %581 = vperm.xlu0 %580, %v559
      %v582 = vpop.permute.xlu0 %581
      %585 = vset.pattern.permute.xlu0 0
      %586 = vperm.xlu0 %585, %v560
      %v587 = vpop.permute.xlu0 %586
      %590 = vset.pattern.permute.xlu0 0
      %591 = vperm.xlu0 %590, %v561
      %v592 = vpop.permute.xlu0 %591
      %595 = vset.pattern.permute.xlu0 0
      %596 = vperm.xlu0 %595, %v562
      %v597 = vpop.permute.xlu0 %596
      %600 = vset.pattern.permute.xlu0 0
      %601 = vperm.xlu0 %600, %v563
      %v602 = vpop.permute.xlu0 %601
      %v612 = vunpack.c.l.b16 %v544
      %v613 = vunpack.c.l.b16 %v545
      %v614 = vunpack.c.l.b16 %v546
      %v615 = vunpack.c.l.b16 %v547
      %v616 = vunpack.c.l.b16 %v548
      %v617 = vunpack.c.l.b16 %v549
      %v618 = vunpack.c.l.b16 %v550
      %v619 = vunpack.c.l.b16 %v551
      %v620 = vpack.c.b16 %v613, %v612
      %v621 = vpack.c.b16 %v615, %v614
      %v622 = vpack.c.b16 %v617, %v616
      %v623 = vpack.c.b16 %v619, %v618
      %vm624 = vcmask 523264
      %v626 = vsel %vm624, %v620, 0
      %v629 = vsel %vm624, %v621, 0
      %v632 = vsel %vm624, %v622, 0
      %v635 = vsel %vm624, %v623, 0
      %637 = vmatprep.subr.bf16.mxu0 0
      %638 = vmatpush1.bf16.msra.mxu0 %v552
      %639 = vmatprep.subr.bf16.mxu0 0
      %640 = vmatpush1.bf16.msra.mxu0 %v553
      %641 = vmatprep.subr.bf16.mxu0 0
      %642 = vmatpush1.bf16.msra.mxu0 %v554
      %643 = vmatprep.subr.bf16.mxu0 0
      %644 = vmatpush1.bf16.msra.mxu0 %v555
      %645 = vmatprep.subr.bf16.mxu0 0
      %646 = vmatpush1.bf16.msra.mxu0 0
      %647 = vmatprep.subr.bf16.mxu0 0
      %648 = vmatpush1.bf16.msra.mxu0 0
      %649 = vmatprep.subr.bf16.mxu0 0
      %650 = vmatpush1.bf16.msra.mxu0 0
      %651 = vmatprep.subr.bf16.mxu0 0
      %652 = vmatpush1.bf16.msra.mxu0 0
      %653 = vmatprep.subr.bf16.mxu0 0
      %654 = vmatpush1.bf16.msra.mxu0 0
      %655 = vmatprep.subr.bf16.mxu0 0
      %656 = vmatpush1.bf16.msra.mxu0 0
      %657 = vmatprep.subr.bf16.mxu0 0
      %658 = vmatpush1.bf16.msra.mxu0 0
      %659 = vmatprep.subr.bf16.mxu0 0
      %660 = vmatpush1.bf16.msra.mxu0 0
      %661 = vmatprep.subr.bf16.mxu0 0
      %662 = vmatpush1.bf16.msra.mxu0 0
      %663 = vmatprep.subr.bf16.mxu0 0
      %664 = vmatpush1.bf16.msra.mxu0 0
      %665 = vmatprep.subr.bf16.mxu0 0
      %666 = vmatpush1.bf16.msra.mxu0 0
      %667 = vmatprep.subr.bf16.mxu0 0
      %668 = vmatpush1.bf16.msra.mxu0 0
      %669 = vmatprep.mubr.bf16.mxu0 0
      %670 = vmatmul.mubr.bf16.gmra.mrb[0].mxu0 %v626
      %v671 = vpop.f32.mrb[0].mxu0
      %v672 = vadd.f32 %v567, %v671
      %v673 = vpop.f32.mrb[0].mxu0
      %v674 = vpop.f32.mrb[0].mxu0
      %v675 = vadd.f32 %v572, %v674
      %v676 = vpop.f32.mrb[0].mxu0
      %677 = vmatprep.mubr.bf16.mxu0 0
      %678 = vmatmul.mubr.bf16.gmra.mrb[0].mxu0 %v629
      %v679 = vpop.f32.mrb[0].mxu0
      %v680 = vadd.f32 %v577, %v679
      %v681 = vpop.f32.mrb[0].mxu0
      %v682 = vpop.f32.mrb[0].mxu0
      %v683 = vadd.f32 %v582, %v682
      %v684 = vpop.f32.mrb[0].mxu0
      %685 = vmatprep.mubr.bf16.mxu0 0
      %686 = vmatmul.mubr.bf16.gmra.mrb[0].mxu0 %v632
      %v687 = vpop.f32.mrb[0].mxu0
      %v688 = vadd.f32 %v587, %v687
      %v689 = vpop.f32.mrb[0].mxu0
      %v690 = vpop.f32.mrb[0].mxu0
      %v691 = vadd.f32 %v592, %v690
      %v692 = vpop.f32.mrb[0].mxu0
      %693 = vmatprep.mubr.bf16.mxu0 0
      %694 = vmatmul.mubr.bf16.gmra.mrb[0].mxu0 %v635
      %v695 = vpop.f32.mrb[0].mxu0
      %v696 = vadd.f32 %v597, %v695
      %v697 = vpop.f32.mrb[0].mxu0
      %v698 = vpop.f32.mrb[0].mxu0
      %v699 = vadd.f32 %v602, %v698
      %v700 = vpop.f32.mrb[0].mxu0
      %701 = vdwg.mxu0
      %v702 = vmax.f32 %v672, 0.0
      %v703 = vmax.f32 %v675, 0.0
      %v704 = vmax.f32 %v680, 0.0
      %v705 = vmax.f32 %v683, 0.0
      %v706 = vmax.f32 %v688, 0.0
      %v707 = vmax.f32 %v691, 0.0
      %v708 = vmax.f32 %v696, 0.0
      %v709 = vmax.f32 %v699, 0.0
      %v710 = vld [vmem:[%s5] sm:$0xf]
      %v711 = vld [vmem:[%s5 + $0x4] sm:$0xf]
      %v712 = vld [vmem:[%s5 + $0x8] sm:$0xf]
      %v713 = vld [vmem:[%s5 + $0xc] sm:$0xf]
      %v714 = vld [vmem:[%s5 + $0x10] sm:$0xf]
      %v715 = vld [vmem:[%s5 + $0x14] sm:$0xf]
      %v716 = vld [vmem:[%s5 + $0x18] sm:$0xf]
      %v717 = vld [vmem:[%s5 + $0x1c] sm:$0xf]
      %v718 = vpack.c.bf16 %v703, %v702
      %v719 = vpack.c.bf16 %v705, %v704
      %v720 = vpack.c.bf16 %v707, %v706
      %v721 = vpack.c.bf16 %v709, %v708
      %v722 = vld [vmem:[%s6] sm:$0xff]
      %v723 = vld [vmem:[%s6 + $0x8] sm:$0xff]
      %v724 = vld [vmem:[%s6 + $0x10] sm:$0xff]
      %v725 = vld [vmem:[%s6 + $0x18] sm:$0xff]
      %v726 = vld [vmem:[%s6 + $0x20] sm:$0xff]
      %v727 = vld [vmem:[%s6 + $0x28] sm:$0xff]
      %v728 = vld [vmem:[%s6 + $0x30] sm:$0xff]
      %v729 = vld [vmem:[%s6 + $0x38] sm:$0xff]
      %731 = vset.pattern.permute.xlu0 0
      %732 = vperm.xlu0 %731, %v722
      %v733 = vpop.permute.xlu0 %732
      %736 = vset.pattern.permute.xlu0 0
      %737 = vperm.xlu0 %736, %v723
      %v738 = vpop.permute.xlu0 %737
      %741 = vset.pattern.permute.xlu0 0
      %742 = vperm.xlu0 %741, %v724
      %v743 = vpop.permute.xlu0 %742
      %746 = vset.pattern.permute.xlu0 0
      %747 = vperm.xlu0 %746, %v725
      %v748 = vpop.permute.xlu0 %747
      %751 = vset.pattern.permute.xlu0 0
      %752 = vperm.xlu0 %751, %v726
      %v753 = vpop.permute.xlu0 %752
      %756 = vset.pattern.permute.xlu0 0
      %757 = vperm.xlu0 %756, %v727
      %v758 = vpop.permute.xlu0 %757
      %761 = vset.pattern.permute.xlu0 0
      %762 = vperm.xlu0 %761, %v728
      %v763 = vpop.permute.xlu0 %762
      %766 = vset.pattern.permute.xlu0 0
      %767 = vperm.xlu0 %766, %v729
      %v768 = vpop.permute.xlu0 %767
      %v778 = vunpack.c.l.b16 %v710
      %v779 = vunpack.c.l.b16 %v711
      %v780 = vunpack.c.l.b16 %v712
      %v781 = vunpack.c.l.b16 %v713
      %v782 = vunpack.c.l.b16 %v714
      %v783 = vunpack.c.l.b16 %v715
      %v784 = vunpack.c.l.b16 %v716
      %v785 = vunpack.c.l.b16 %v717
      %v786 = vpack.c.b16 %v779, %v778
      %v787 = vpack.c.b16 %v781, %v780
      %v788 = vpack.c.b16 %v783, %v782
      %v789 = vpack.c.b16 %v785, %v784
      %v791 = vsel %vm624, %v786, 0
      %v794 = vsel %vm624, %v787, 0
      %v797 = vsel %vm624, %v788, 0
      %v800 = vsel %vm624, %v789, 0
      %802 = vmatprep.subr.bf16.mxu0 0
      %803 = vmatpush1.bf16.msra.mxu0 %v718
      %804 = vmatprep.subr.bf16.mxu0 0
      %805 = vmatpush1.bf16.msra.mxu0 %v719
      %806 = vmatprep.subr.bf16.mxu0 0
      %807 = vmatpush1.bf16.msra.mxu0 %v720
      %808 = vmatprep.subr.bf16.mxu0 0
      %809 = vmatpush1.bf16.msra.mxu0 %v721
      %810 = vmatprep.subr.bf16.mxu0 0
      %811 = vmatpush1.bf16.msra.mxu0 0
      %812 = vmatprep.subr.bf16.mxu0 0
      %813 = vmatpush1.bf16.msra.mxu0 0
      %814 = vmatprep.subr.bf16.mxu0 0
      %815 = vmatpush1.bf16.msra.mxu0 0
      %816 = vmatprep.subr.bf16.mxu0 0
      %817 = vmatpush1.bf16.msra.mxu0 0
      %818 = vmatprep.subr.bf16.mxu0 0
      %819 = vmatpush1.bf16.msra.mxu0 0
      %820 = vmatprep.subr.bf16.mxu0 0
      %821 = vmatpush1.bf16.msra.mxu0 0
      %822 = vmatprep.subr.bf16.mxu0 0
      %823 = vmatpush1.bf16.msra.mxu0 0
      %824 = vmatprep.subr.bf16.mxu0 0
      %825 = vmatpush1.bf16.msra.mxu0 0
      %826 = vmatprep.subr.bf16.mxu0 0
      %827 = vmatpush1.bf16.msra.mxu0 0
      %828 = vmatprep.subr.bf16.mxu0 0
      %829 = vmatpush1.bf16.msra.mxu0 0
      %830 = vmatprep.subr.bf16.mxu0 0
      %831 = vmatpush1.bf16.msra.mxu0 0
      %832 = vmatprep.subr.bf16.mxu0 0
      %833 = vmatpush1.bf16.msra.mxu0 0
      %834 = vmatprep.mubr.bf16.mxu0 0
      %835 = vmatmul.mubr.bf16.gmra.mrb[0].mxu0 %v791
      %v836 = vpop.f32.mrb[0].mxu0
      %v837 = vadd.f32 %v733, %v836
      %v838 = vpop.f32.mrb[0].mxu0
      %v839 = vpop.f32.mrb[0].mxu0
      %v840 = vadd.f32 %v738, %v839
      %v841 = vpop.f32.mrb[0].mxu0
      %842 = vmatprep.mubr.bf16.mxu0 0
      %843 = vmatmul.mubr.bf16.gmra.mrb[0].mxu0 %v794
      %v844 = vpop.f32.mrb[0].mxu0
      %v845 = vadd.f32 %v743, %v844
      %v846 = vpop.f32.mrb[0].mxu0
      %v847 = vpop.f32.mrb[0].mxu0
      %v848 = vadd.f32 %v748, %v847
      %v849 = vpop.f32.mrb[0].mxu0
      %850 = vmatprep.mubr.bf16.mxu0 0
      %851 = vmatmul.mubr.bf16.gmra.mrb[0].mxu0 %v797
      %v852 = vpop.f32.mrb[0].mxu0
      %v853 = vadd.f32 %v753, %v852
      %v854 = vpop.f32.mrb[0].mxu0
      %v855 = vpop.f32.mrb[0].mxu0
      %v856 = vadd.f32 %v758, %v855
      %v857 = vpop.f32.mrb[0].mxu0
      %858 = vmatprep.mubr.bf16.mxu0 0
      %859 = vmatmul.mubr.bf16.gmra.mrb[0].mxu0 %v800
      %v860 = vpop.f32.mrb[0].mxu0
      %v861 = vadd.f32 %v763, %v860
      %v862 = vpop.f32.mrb[0].mxu0
      %v863 = vpop.f32.mrb[0].mxu0
      %v864 = vadd.f32 %v768, %v863
      %v865 = vpop.f32.mrb[0].mxu0
      %866 = vdwg.mxu0
      %v867 = vmax.f32 %v837, 0.0
      %v868 = vmax.f32 %v840, 0.0
      %v869 = vmax.f32 %v845, 0.0
      %v870 = vmax.f32 %v848, 0.0
      %v871 = vmax.f32 %v853, 0.0
      %v872 = vmax.f32 %v856, 0.0
      %v873 = vmax.f32 %v861, 0.0
      %v874 = vmax.f32 %v864, 0.0
      %v875 = vld [vmem:[%s7] sm:$0xf]
      %v876 = vpack.c.bf16 %v868, %v867
      %v877 = vpack.c.bf16 %v870, %v869
      %v878 = vpack.c.bf16 %v872, %v871
      %v879 = vpack.c.bf16 %v874, %v873
      %v880 = vld [vmem:[%s8] sm:$0xff]
      %882 = vset.pattern.permute.xlu0 0
      %883 = vperm.xlu0 %882, %v880
      %v884 = vpop.permute.xlu0 %883
      %v887 = vsel %vm624, %v875, 0
      %889 = vmatprep.subr.bf16.mxu0 0
      %890 = vmatpush1.bf16.msra.mxu0 %v876
      %891 = vmatprep.subr.bf16.mxu0 0
      %892 = vmatpush1.bf16.msra.mxu0 %v877
      %893 = vmatprep.subr.bf16.mxu0 0
      %894 = vmatpush1.bf16.msra.mxu0 %v878
      %895 = vmatprep.subr.bf16.mxu0 0
      %896 = vmatpush1.bf16.msra.mxu0 %v879
      %897 = vmatprep.subr.bf16.mxu0 0
      %898 = vmatpush1.bf16.msra.mxu0 0
      %899 = vmatprep.subr.bf16.mxu0 0
      %900 = vmatpush1.bf16.msra.mxu0 0
      %901 = vmatprep.subr.bf16.mxu0 0
      %902 = vmatpush1.bf16.msra.mxu0 0
      %903 = vmatprep.subr.bf16.mxu0 0
      %904 = vmatpush1.bf16.msra.mxu0 0
      %905 = vmatprep.subr.bf16.mxu0 0
      %906 = vmatpush1.bf16.msra.mxu0 0
      %907 = vmatprep.subr.bf16.mxu0 0
      %908 = vmatpush1.bf16.msra.mxu0 0
      %909 = vmatprep.subr.bf16.mxu0 0
      %910 = vmatpush1.bf16.msra.mxu0 0
      %911 = vmatprep.subr.bf16.mxu0 0
      %912 = vmatpush1.bf16.msra.mxu0 0
      %913 = vmatprep.subr.bf16.mxu0 0
      %914 = vmatpush1.bf16.msra.mxu0 0
      %915 = vmatprep.subr.bf16.mxu0 0
      %916 = vmatpush1.bf16.msra.mxu0 0
      %917 = vmatprep.subr.bf16.mxu0 0
      %918 = vmatpush1.bf16.msra.mxu0 0
      %919 = vmatprep.subr.bf16.mxu0 0
      %920 = vmatpush1.bf16.msra.mxu0 0
      %921 = vmatprep.mubr.bf16.mxu0 0
      %922 = vmatmul.mubr.bf16.gmra.mrb[0].mxu0 %v887
      %v923 = vpop.f32.mrb[0].mxu0
      %v924 = vadd.f32 %v884, %v923
      %v925 = vpop.f32.mrb[0].mxu0
      %v926 = vpop.f32.mrb[0].mxu0
      %v927 = vpop.f32.mrb[0].mxu0
      %928 = vdwg.mxu0
      %929 = vst [vmem:[%s332] sm:$0xff] %v924
      %p930 = scmp.lt.s32.totalorder %s20, 1
      %s931 = scalar_select %p930, %s20, 1
      %s932 = smul.addr %s931, 8
      %s933 = scalar_lea.vmem %s9, %s932
      // Predicated region
      $region57: #{mlp_forward.1} parent=55 // pred_check
        %p934 = pneg %p232
      $region58: #{mlp_forward.1} parent=55 // pred_check_branch
        %936 = sbr.rel (%p934) target = $region60
      $region59: #{mlp_forward.1} parent=55 // pred_region
        _
      $region60: #{mlp_forward.1} parent=55 // pred_fallthru
        _
    $region56: #{mlp_forward.1} parent=5 // pred_fallthru
      _
    %p937 = scmp.le.s32.totalorder 2, %s15
    // Predicated region
    $region61: #{mlp_forward.1} parent=5 // pred_check
      %p938 = pneg %p937
    $region62: #{mlp_forward.1} parent=5 // pred_check_branch
      %940 = sbr.rel (%p938) target = $region64
    $region63: #{mlp_forward.1} parent=5 // pred_region
      %s941 = ssub.s32 %s15, 2
      // Predicated region
      $region65: #{mlp_forward.1} parent=63 // pred_check
        %p942 = pneg %p238
      $region66: #{mlp_forward.1} parent=63 // pred_check_branch
        %944 = sbr.rel (%p942) target = $region68
      $region67: #{mlp_forward.1} parent=63 // pred_region
        %p945 = scmp.lt.s32.totalorder %s21, 1
        %s946 = scalar_select %p945, %s21, 1
        %s947 = smul.addr %s946, 8
        %s948 = scalar_lea.vmem %s9, %s947
      $region68: #{mlp_forward.1} parent=63 // pred_fallthru
        _
    $region64: #{mlp_forward.1} parent=5 // pred_fallthru
      _
  $region6: #{mlp_forward.1} parent=0 // loop_footer
    %s19 = sadd.s32 1, %s15
  $region7: #{mlp_forward.1} parent=0 // loop_footer_branch
    %14 = sbr.rel target = $region3
  $region8: #{mlp_forward.1} parent=0 // loop_exit
    _

</llo_original>
